<compile_context>
chip_gen: v5e
topology: v5e:2x2
jax: 0.10.0
libtpu: 0.0.40
codegen_flags: <defaults>
</compile_context>

<pallas_src>
import functools
import math

import jax
import jax.numpy as jnp
from jax.experimental import pallas as pl
from jax.experimental.pallas import tpu as pltpu

_MIB = 1024 * 1024


def _conv1x1_silu_kernel(x_ref, w_ref, b_ref, o_ref, *, compute_dtype):
    # x_ref: (1, C, T)   w_ref: (tk, C)   b_ref: (tk, 1)   o_ref: (1, tk, T)
    x = x_ref[0]                                  # (C, T), spatial in the lane dim
    if x.dtype != compute_dtype:
        x = x.astype(compute_dtype)
    y = jnp.dot(w_ref[...], x, preferred_element_type=jnp.float32)   # (tk, T) MXU
    y = y + b_ref[...]                            # bias broadcast along lanes (f32)
    y = y * jax.nn.sigmoid(y)                     # SiLU epilogue in f32 (EUP)
    o_ref[0] = y.astype(o_ref.dtype)


def _vmem_limit_bytes():
    cap = 64 * _MIB
    try:
        info = pltpu.get_tpu_info()
        cap = int(getattr(info, "vmem_capacity_bytes", cap)) or cap
    except Exception:
        pass
    # leave headroom for Mosaic's own scratch; never ask for more than ~100 MiB
    return max(min(int(cap * 0.7), 100 * _MIB), 16 * _MIB)


def _pick_k_tile(K, C, w_bytes, budget):
    """Largest divisor of K (multiple of 8, or K itself) whose (tk,C) tile fits."""
    if K * C * w_bytes <= budget:
        return K
    best = None
    for tk in range(8, K + 1, 8):
        if K % tk == 0 and tk * C * w_bytes <= budget:
            best = tk
    return best if best is not None else K


def _pick_row_tile(H, W, per_pixel_bytes, budget):
    """Rows per grid step: divides H, lane-aligned (th*W % 128 == 0 or full image),
    and the double-buffered streams fit `budget`."""
    best = None
    for th in range(1, H + 1):
        if H % th:
            continue
        if (th * W) % 128 != 0 and th != H:
            continue
        if 2 * th * W * per_pixel_bytes <= budget:
            best = th
    if best is None:  # nothing fits the budget -> smallest legal tile
        for th in range(1, H + 1):
            if H % th == 0 and ((th * W) % 128 == 0 or th == H):
                best = th
                break
    return best


def _maybe_split_for_megacore(th, H, W, n_other_steps):
    """Keep the total grid >= 2 steps so v7x's two TensorCores both get work."""
    if th is None or n_other_steps >= 2:
        return th
    for cand in range(th - 1, 0, -1):
        if H % cand == 0 and (cand * W) % 128 == 0 and H // cand >= 2:
            return cand
    return th


def pixel_shuffle_upsample(x, weight, bias, *, compute_dtype=None, out_dtype=None):
    """Forward pass of PixelShuffleUpsample.

    x:      (B, C, H, W)          NCHW (PyTorch convention)
    weight: (4*dim_out, C, 1, 1)  conv weight
    bias:   (4*dim_out,)          conv bias
    returns (B, dim_out, 2H, 2W)
    """
    B, C, H, W = x.shape
    K = weight.shape[0]                 # 4 * dim_out
    dim_out = K // 4

    compute_dtype = jnp.dtype(x.dtype if compute_dtype is None else compute_dtype)
    out_dtype = jnp.dtype(x.dtype if out_dtype is None else out_dtype)

    x3 = x.reshape(B, C, H * W)                         # free reshape, stays NCHW
    w_mat = weight.reshape(K, C).astype(compute_dtype)  # (K, C), tiny one-time cast
    b_mat = bias.astype(jnp.float32).reshape(K, 1)      # (K, 1), f32 bias

    x_bytes = jnp.dtype(x.dtype).itemsize
    w_bytes = compute_dtype.itemsize
    o_bytes = out_dtype.itemsize

    vmem_limit = _vmem_limit_bytes()
    tk = _pick_k_tile(K, C, w_bytes, budget=min(8 * _MIB, vmem_limit // 6))
    stream_budget = int(0.75 * vmem_limit) - 2 * tk * C * w_bytes - 2 * tk * 4
    per_pixel = C * x_bytes + tk * o_bytes
    th = _pick_row_tile(H, W, per_pixel, stream_budget)
    th = _maybe_split_for_megacore(th, H, W, B * (K // tk))

    T = th * W                     # spatial pixels per grid step (lane dim)
    n_r = (H * W) // T
    n_k = K // tk
    grid = (n_k, B, n_r)           # weight tile outermost -> resident across (B, rows)

    kernel = functools.partial(_conv1x1_silu_kernel, compute_dtype=compute_dtype)
    y = pl.pallas_call(
        kernel,
        out_shape=jax.ShapeDtypeStruct((B, K, H * W), out_dtype),
        grid=grid,
        in_specs=[
            pl.BlockSpec((1, C, T), lambda kk, b, r: (b, 0, r)),   # activations
            pl.BlockSpec((tk, C), lambda kk, b, r: (kk, 0)),       # weight tile
            pl.BlockSpec((tk, 1), lambda kk, b, r: (kk, 0)),       # bias tile
        ],
        out_specs=pl.BlockSpec((1, tk, T), lambda kk, b, r: (b, kk, r)),
        compiler_params=pltpu.CompilerParams(
            dimension_semantics=("parallel", "parallel", "parallel"),
            vmem_limit_bytes=vmem_limit,
        ),
    )(x3, w_mat, b_mat)

    # PixelShuffle(2): channel k = 4*c + 2*rh + rw  ->  output (c, 2h+rh, 2w+rw).
    # TODO(synk): single XLA transpose pass; see header comment.
    y = y.reshape(B, dim_out, 2, 2, H, W)
    y = jnp.transpose(y, (0, 1, 4, 2, 5, 3))
    return y.reshape(B, dim_out, 2 * H, 2 * W)


def init_params(key, dim, dim_out=None):
    """Deterministic re-implementation of PixelShuffleUpsample.__init__/init_conv_."""
    dim_out = dim if dim_out is None else dim_out
    fan_in = dim * 1 * 1
    # nn.init.kaiming_uniform_ default: gain=sqrt(2), bound = sqrt(6/fan_in)
    bound = math.sqrt(6.0 / fan_in)
    w_base = jax.random.uniform(key, (dim_out, dim), jnp.float32, -bound, bound)
    # repeat(conv_weight, 'o ... -> (o 4) ...') -> each base filter repeated 4x adjacently
    w_full = jnp.repeat(w_base, 4, axis=0).reshape(dim_out * 4, dim, 1, 1)
    b_full = jnp.zeros((dim_out * 4,), jnp.float32)
    return w_full, b_full


if __name__ == "__main__":
    key = jax.random.PRNGKey(0)
    k_x, k_w = jax.random.split(key)

    B, dim, H, W = 2, 4, 16, 16
    x = jax.random.normal(k_x, (B, dim, H, W), jnp.float32)
    weight, bias = init_params(k_w, dim)
    dim_out = weight.shape[0] // 4

    # Reference (plain JAX): conv1x1 + SiLU + PixelShuffle(2).
    y_ref = jnp.einsum("bchw,kc->bkhw", x, weight.reshape(-1, dim)) + bias[None, :, None, None]
    y_ref = y_ref * jax.nn.sigmoid(y_ref)
    y_ref = y_ref.reshape(B, dim_out, 2, 2, H, W)
    y_ref = jnp.transpose(y_ref, (0, 1, 4, 2, 5, 3)).reshape(B, dim_out, 2 * H, 2 * W)

    # f32 compute: exact semantics of the PyTorch module.
    fwd_f32 = jax.jit(functools.partial(pixel_shuffle_upsample, compute_dtype=jnp.float32))
    out = jax.block_until_ready(fwd_f32(x, weight, bias))
    assert out.shape == (B, dim_out, 2 * H, 2 * W)
    assert jnp.max(jnp.abs(out - y_ref)) < 1e-5

    # bf16 compute (per perf review): bf16 MXU inputs, f32 accumulate + f32 SiLU.
    fwd_bf16 = jax.jit(functools.partial(pixel_shuffle_upsample, compute_dtype=jnp.bfloat16))
    out_bf16 = jax.block_until_ready(fwd_bf16(x, weight, bias))
    assert jnp.max(jnp.abs(out_bf16 - y_ref)) < 5e-2

    print("KERNEL_OK")
</pallas_src>

<mosaic_0001>
module attributes {stable_mosaic.version = 11 : i64} {
  func.func @_conv1x1_silu_kernel(%arg0: i32, %arg1: i32, %arg2: i32, %arg3: memref<1x4x256xf32, #tpu.memory_space<vmem>>, %arg4: memref<16x4xf32, #tpu.memory_space<vmem>>, %arg5: memref<16x1xf32, #tpu.memory_space<vmem>>, %arg6: memref<1x16x256xf32, #tpu.memory_space<vmem>>) attributes {dimension_semantics = [#tpu.dimension_semantics<parallel>, #tpu.dimension_semantics<parallel>, #tpu.dimension_semantics<parallel>], iteration_bounds = array<i64: 1, 2, 1>, scalar_prefetch = 0 : i64, scratch_operands = 0 : i64, tpu.core_type = #tpu.core_type<tc>, window_params = [{transform_indices = @transform_0, window_bounds = array<i64: 1, 4, 256>}, {transform_indices = @transform_1, window_bounds = array<i64: 16, 4>}, {transform_indices = @transform_2, window_bounds = array<i64: 16, 1>}, {transform_indices = @transform_3, window_bounds = array<i64: 1, 16, 256>}]} {
    %c0 = arith.constant 0 : index
    %c0_0 = arith.constant 0 : index
    %c0_1 = arith.constant 0 : index
    %0 = vector.load %arg3[%c0, %c0_0, %c0_1] : memref<1x4x256xf32, #tpu.memory_space<vmem>>, vector<1x4x256xf32>
    %1 = vector.shape_cast %0 : vector<1x4x256xf32> to vector<4x256xf32>
    %c0_2 = arith.constant 0 : index
    %c0_3 = arith.constant 0 : index
    %2 = vector.load %arg4[%c0_2, %c0_3] : memref<16x4xf32, #tpu.memory_space<vmem>>, vector<16x4xf32>
    %cst = arith.constant dense<0.000000e+00> : vector<16x256xf32>
    %3 = tpu.matmul %2, %1, %cst {dimension_numbers = #tpu.dot_dimension_numbers<[1], [0], [0], [1], [0, 0, 1, 1], [], []>} : vector<16x4xf32>, vector<4x256xf32>, vector<16x256xf32> -> vector<16x256xf32>
    %c0_4 = arith.constant 0 : index
    %c0_5 = arith.constant 0 : index
    %4 = vector.load %arg5[%c0_4, %c0_5] : memref<16x1xf32, #tpu.memory_space<vmem>>, vector<16x1xf32>
    %5 = vector.broadcast %4 : vector<16x1xf32> to vector<16x256xf32>
    %6 = arith.addf %3, %5 : vector<16x256xf32>
    %7 = arith.negf %6 : vector<16x256xf32>
    %8 = math.exp %7 : vector<16x256xf32>
    %cst_6 = arith.constant 1.000000e+00 : f32
    %9 = vector.broadcast %cst_6 : f32 to vector<16x256xf32>
    %10 = arith.addf %9, %8 : vector<16x256xf32>
    %11 = arith.divf %9, %10 : vector<16x256xf32>
    %12 = arith.mulf %6, %11 : vector<16x256xf32>
    %c0_7 = arith.constant 0 : index
    %c0_8 = arith.constant 0 : index
    %c0_9 = arith.constant 0 : index
    %13 = vector.load %arg6[%c0_7, %c0_8, %c0_9] : memref<1x16x256xf32, #tpu.memory_space<vmem>>, vector<1x16x256xf32>
    %14 = vector.shape_cast %13 : vector<1x16x256xf32> to vector<16x256xf32>
    %15 = vector.shape_cast %12 : vector<16x256xf32> to vector<1x16x256xf32>
    tpu.vector_store %arg6[%c0_7, %c0_8, %c0_9], %15 {strides = array<i32>} : memref<1x16x256xf32, #tpu.memory_space<vmem>>, vector<1x16x256xf32>,
    return
  }
  func.func @transform_0(%arg0: i32, %arg1: i32, %arg2: i32) -> (i32, i32, i32) {
    %c0_i32 = arith.constant 0 : i32
    %c0_i32_0 = arith.constant 0 : i32
    return %arg1, %c0_i32, %arg2 : i32, i32, i32
  }
  func.func @transform_1(%arg0: i32, %arg1: i32, %arg2: i32) -> (i32, i32) {
    %c0_i32 = arith.constant 0 : i32
    %c0_i32_0 = arith.constant 0 : i32
    return %arg0, %c0_i32 : i32, i32
  }
  func.func @transform_2(%arg0: i32, %arg1: i32, %arg2: i32) -> (i32, i32) {
    %c0_i32 = arith.constant 0 : i32
    %c0_i32_0 = arith.constant 0 : i32
    return %arg0, %c0_i32 : i32, i32
  }
  func.func @transform_3(%arg0: i32, %arg1: i32, %arg2: i32) -> (i32, i32, i32) {
    %c0_i32 = arith.constant 0 : i32
    return %arg1, %arg0, %arg2 : i32, i32, i32
  }
}

</mosaic_0001>

<llo_original>
// kernel: pixel_shuffle_upsample.1
$region0: #{pixel_shuffle_upsample.1}
  #allocation0 [shape = 'u32[]', space=smem, size = 0x4, offset = 0x4, fixed_abs, tag = 'smem constant byte address 0x4 - core index']
  #allocation1 [shape = 'u32[72,128]{1,0:T(1,128)}', space=vmem, size = 0x9000, scoped, tag = 'internal scratch']
  %s0 = inlined_call_operand.vmem [shape: f32[2,4,256], index: 0, kind: input, shape index: {}]
  %s1 = inlined_call_operand.vmem [shape: f32[16,4], index: 1, kind: input, shape index: {}]
  %s2 = inlined_call_operand.vmem [shape: f32[16,1], index: 2, kind: input, shape index: {}]
  %s3 = inlined_call_operand.vmem [shape: f32[2,16,256], index: 3, kind: output, shape index: {}]
  %s4 = sld [smem:[#allocation0]]
  $region45: #{pixel_shuffle_upsample.1} parent=0
    _
  %s6 = ssub.s32 1, %s4
  %s7 = scalar_select 0, %s6, %s4
  loop: start=0, step=1, limit=4
  $region2: #{pixel_shuffle_upsample.1} parent=0 // loop_pre_header
    _
  $region3: #{pixel_shuffle_upsample.1} parent=0 // loop_header
    %s9 = sphi 0, %s13
    %p10 = scmp.ge.s32.totalorder %s9, 4
    %s16 = sphi 0, %s35
    %s17 = sphi 0, %s31
    %s18 = sphi 0, %s27
    %s19 = sphi 0, %s16
    %s20 = sphi 0, %s17
    %s21 = sphi 0, %s18
    %s22 = sphi 0, %s19
    %s23 = sphi 0, %s20
    %s24 = sphi 0, %s21
    %s40 = sphi 0, %s42
    %s43 = sphi 0, %s40
    %s44 = sphi 0, %s43
    %s60 = sphi 0, %s44
    %s66 = sphi 0, %s68
    %s69 = sphi 0, %s66
    %s70 = sphi 0, %s69
    %s86 = sphi 0, %s70
    %s92 = sphi 0, %s94
    %s95 = sphi 0, %s92
    %s96 = sphi 0, %s95
    %s112 = sphi 0, %s96
    %s122 = sphi 0, %s124
    %s125 = sphi 0, %s122
    %s126 = sphi 0, %s125
    %s142 = sphi 0, %s126
  $region4: #{pixel_shuffle_upsample.1} parent=0 // loop_header_branch
    %12 = sbr.rel (%p10) target = $region8
  $region5: #{pixel_shuffle_upsample.1} parent=0 // loop_body
    %s14 = ssub.s32 %s9, 1
    %s15 = ssub.s32 %s9, 2
    %s25 = sadd.s32 1, %s18
    %p26 = scmp.ge.s32.totalorder %s25, 1
    %s27 = scalar_select %p26, 0, %s25
    %s28 = sadd.s32 1, %s17
    %s29 = scalar_select %p26, %s28, %s17
    %p30 = scmp.ge.s32.totalorder %s29, 2
    %s31 = scalar_select %p30, 0, %s29
    %s32 = sadd.s32 1, %s16
    %s33 = scalar_select %p30, %s32, %s16
    %p34 = scmp.ge.s32.totalorder %s33, 1
    %s35 = scalar_select %p34, 0, %s33
    %s36 = ssub.s32 %s17, %s31
    %s37 = ssub.s32 %s18, %s27
    %s38 = sor.u32 %s36, %s37
    %p39 = scmp.eq.s32.totalorder %s38, 0
    %s41 = sadd.s32 %s40, 1
    %s42 = scalar_select %p39, %s40, %s41
    %p45 = pneg %p39
    %p46 = scmp.eq.s32.totalorder %s9, 1
    %p47 = por %p45, %p46
    %p48 = scmp.ne.s32.totalorder %s40, %s43
    %p49 = scmp.eq.s32.totalorder %s9, 0
    %p50 = por %p48, %p49
    %p51 = scmp.ne.s32.totalorder %s40, %s43
    %p52 = scmp.eq.s32.totalorder %s14, 1
    %p53 = por %p51, %p52
    %p54 = scmp.ne.s32.totalorder %s43, %s44
    %p55 = scmp.eq.s32.totalorder %s14, 0
    %p56 = por %p54, %p55
    %p57 = scmp.ne.s32.totalorder %s43, %s44
    %p58 = scmp.eq.s32.totalorder %s15, 1
    %p59 = por %p57, %p58
    %p61 = scmp.ne.s32.totalorder %s44, %s60
    %p62 = scmp.eq.s32.totalorder %s15, 0
    %p63 = por %p61, %p62
    %s64 = ssub.s32 %s16, %s35
    %p65 = scmp.eq.s32.totalorder %s64, 0
    %s67 = sadd.s32 %s66, 1
    %s68 = scalar_select %p65, %s66, %s67
    %p71 = pneg %p65
    %p72 = scmp.eq.s32.totalorder %s9, 1
    %p73 = por %p71, %p72
    %p74 = scmp.ne.s32.totalorder %s66, %s69
    %p75 = scmp.eq.s32.totalorder %s9, 0
    %p76 = por %p74, %p75
    %p77 = scmp.ne.s32.totalorder %s66, %s69
    %p78 = scmp.eq.s32.totalorder %s14, 1
    %p79 = por %p77, %p78
    %p80 = scmp.ne.s32.totalorder %s69, %s70
    %p81 = scmp.eq.s32.totalorder %s14, 0
    %p82 = por %p80, %p81
    %p83 = scmp.ne.s32.totalorder %s69, %s70
    %p84 = scmp.eq.s32.totalorder %s15, 1
    %p85 = por %p83, %p84
    %p87 = scmp.ne.s32.totalorder %s70, %s86
    %p88 = scmp.eq.s32.totalorder %s15, 0
    %p89 = por %p87, %p88
    %s90 = ssub.s32 %s16, %s35
    %p91 = scmp.eq.s32.totalorder %s90, 0
    %s93 = sadd.s32 %s92, 1
    %s94 = scalar_select %p91, %s92, %s93
    %p97 = pneg %p91
    %p98 = scmp.eq.s32.totalorder %s9, 1
    %p99 = por %p97, %p98
    %p100 = scmp.ne.s32.totalorder %s92, %s95
    %p101 = scmp.eq.s32.totalorder %s9, 0
    %p102 = por %p100, %p101
    %p103 = scmp.ne.s32.totalorder %s92, %s95
    %p104 = scmp.eq.s32.totalorder %s14, 1
    %p105 = por %p103, %p104
    %p106 = scmp.ne.s32.totalorder %s95, %s96
    %p107 = scmp.eq.s32.totalorder %s14, 0
    %p108 = por %p106, %p107
    %p109 = scmp.ne.s32.totalorder %s95, %s96
    %p110 = scmp.eq.s32.totalorder %s15, 1
    %p111 = por %p109, %p110
    %p113 = scmp.ne.s32.totalorder %s96, %s112
    %p114 = scmp.eq.s32.totalorder %s15, 0
    %p115 = por %p113, %p114
    %s116 = ssub.s32 %s17, %s31
    %s117 = ssub.s32 %s16, %s35
    %s118 = sor.u32 %s116, %s117
    %s119 = ssub.s32 %s18, %s27
    %s120 = sor.u32 %s118, %s119
    %p121 = scmp.eq.s32.totalorder %s120, 0
    %s123 = sadd.s32 %s122, 1
    %s124 = scalar_select %p121, %s122, %s123
    %p127 = pneg %p121
    %p128 = scmp.eq.s32.totalorder %s9, 1
    %p129 = por %p127, %p128
    %p130 = scmp.ne.s32.totalorder %s122, %s125
    %p131 = scmp.eq.s32.totalorder %s9, 0
    %p132 = por %p130, %p131
    %p133 = scmp.ne.s32.totalorder %s122, %s125
    %p134 = scmp.eq.s32.totalorder %s14, 1
    %p135 = por %p133, %p134
    %p136 = scmp.ne.s32.totalorder %s125, %s126
    %p137 = scmp.eq.s32.totalorder %s14, 0
    %p138 = por %p136, %p137
    %p139 = scmp.ne.s32.totalorder %s125, %s126
    %p140 = scmp.eq.s32.totalorder %s15, 1
    %p141 = por %p139, %p140
    %p143 = scmp.ne.s32.totalorder %s126, %s142
    %p144 = scmp.eq.s32.totalorder %s15, 0
    %p145 = por %p143, %p144
    %p146 = scmp.le.s32.totalorder 1, %s9
    %p147 = scmp.lt.s32.totalorder %s9, 3
    %p148 = pnand %p146, %p147
    %p149 = pneg %p148
    // Predicated region
    $region9: #{pixel_shuffle_upsample.1} parent=5 // pred_check
      _
    $region10: #{pixel_shuffle_upsample.1} parent=5 // pred_check_branch
      %151 = sbr.rel (%p148) target = $region12
    $region11: #{pixel_shuffle_upsample.1} parent=5 // pred_region
      %s152 = ssub.s32 %s9, 1
      // Predicated region
      $region13: #{pixel_shuffle_upsample.1} parent=11 // pred_check
        %p153 = pneg %p82
      $region14: #{pixel_shuffle_upsample.1} parent=11 // pred_check_branch
        %155 = sbr.rel (%p153) target = $region16
      $region15: #{pixel_shuffle_upsample.1} parent=11 // pred_region
        %s156 = smul.u32 2, %s19
        %p157 = scmp.lt.s32.totalorder %s156, 1
        %s158 = scalar_select %p157, %s156, 1
        %s159 = smul.addr %s158, 8
        %s160 = scalar_lea.vmem %s1, %s159
        %s161 = smul.u32 2, %s19
      $region16: #{pixel_shuffle_upsample.1} parent=11 // pred_fallthru
        _
      // Predicated region
      $region17: #{pixel_shuffle_upsample.1} parent=11 // pred_check
        %p162 = pneg %p108
      $region18: #{pixel_shuffle_upsample.1} parent=11 // pred_check_branch
        %164 = sbr.rel (%p162) target = $region20
      $region19: #{pixel_shuffle_upsample.1} parent=11 // pred_region
        %s165 = smul.u32 2, %s19
        %p166 = scmp.lt.s32.totalorder %s165, 1
        %s167 = scalar_select %p166, %s165, 1
        %s168 = smul.addr %s167, 8
        %s169 = scalar_lea.vmem %s2, %s168
        %s170 = smul.u32 2, %s19
      $region20: #{pixel_shuffle_upsample.1} parent=11 // pred_fallthru
        _
    $region12: #{pixel_shuffle_upsample.1} parent=5 // pred_fallthru
      _
    %p171 = scmp.lt.s32.totalorder %s9, 2
    // Predicated region
    $region21: #{pixel_shuffle_upsample.1} parent=5 // pred_check
      %p172 = pneg %p171
    $region22: #{pixel_shuffle_upsample.1} parent=5 // pred_check_branch
      %174 = sbr.rel (%p172) target = $region24
    $region23: #{pixel_shuffle_upsample.1} parent=5 // pred_region
      // Predicated region
      $region25: #{pixel_shuffle_upsample.1} parent=23 // pred_check
        %p175 = pneg %p50
      $region26: #{pixel_shuffle_upsample.1} parent=23 // pred_check_branch
        %177 = sbr.rel (%p175) target = $region28
      $region27: #{pixel_shuffle_upsample.1} parent=23 // pred_region
        %s178 = smul.u32 2, %s18
        %p179 = scmp.lt.s32.totalorder %s17, 1
        %s180 = scalar_select %p179, %s17, 1
        %p181 = scmp.lt.s32.totalorder %s178, 1
        %s182 = scalar_select %p181, %s178, 1
        %s183 = smul.addr %s180, 2
        %s184 = sadd.s32 %s182, %s183
        %s185 = smul.addr %s184, 4
        %s186 = scalar_lea.vmem %s0, %s185
        %s187 = smul.u32 2, %s18
      $region28: #{pixel_shuffle_upsample.1} parent=23 // pred_fallthru
        _
    $region24: #{pixel_shuffle_upsample.1} parent=5 // pred_fallthru
      _
    %p188 = scmp.le.s32.totalorder 1, %s9
    %p189 = scmp.lt.s32.totalorder %s9, 3
    %p190 = pnand %p188, %p189
    %p191 = pneg %p190
    // Predicated region
    $region29: #{pixel_shuffle_upsample.1} parent=5 // pred_check
      _
    $region30: #{pixel_shuffle_upsample.1} parent=5 // pred_check_branch
      %193 = sbr.rel (%p190) target = $region32
    $region31: #{pixel_shuffle_upsample.1} parent=5 // pred_region
      %s194 = ssub.s32 %s9, 1
      %s195 = smul.u32 2, %s21
      %p196 = scmp.lt.s32.totalorder %s20, 1
      %s197 = scalar_select %p196, %s20, 1
      %p198 = scmp.lt.s32.totalorder %s195, 1
      %s199 = scalar_select %p198, %s195, 1
      %s200 = smul.addr %s197, 2
      %s201 = sadd.s32 %s199, %s200
      %s202 = smul.addr %s201, 4
      %s203 = scalar_lea.vmem %s0, %s202
      %p204 = pneg %p56
      %p205 = pneg %p53
      %s206 = smul.u32 2, %s19
      %p207 = scmp.lt.s32.totalorder %s206, 1
      %s208 = scalar_select %p207, %s206, 1
      %s209 = smul.addr %s208, 8
      %s210 = scalar_lea.vmem %s1, %s209
      %p211 = pneg %p82
      %p212 = pneg %p79
      %s213 = smul.u32 2, %s19
      %p214 = scmp.lt.s32.totalorder %s213, 1
      %s215 = scalar_select %p214, %s213, 1
      %s216 = smul.addr %s215, 8
      %s217 = scalar_lea.vmem %s2, %s216
      %p218 = pneg %p108
      %p219 = pneg %p105
      %p220 = pneg %p138
      %p221 = pneg %p135
      %s222 = smul.u32 2, %s19
      %s223 = smul.u32 2, %s21
      %p224 = scmp.lt.s32.totalorder %s20, 1
      %s225 = scalar_select %p224, %s20, 1
      %p226 = scmp.lt.s32.totalorder %s222, 1
      %s227 = scalar_select %p226, %s222, 1
      %p228 = scmp.lt.s32.totalorder %s223, 1
      %s229 = scalar_select %p228, %s223, 1
      %s230 = smul.addr %s227, 2
      %s231 = sadd.s32 %s229, %s230
      %s232 = smul.addr %s225, 4
      %s233 = sadd.s32 %s231, %s232
      %s234 = smul.addr %s233, 8
      %s235 = scalar_lea.vmem %s3, %s234
      %s236 = smul.u32 2, %s21
      %p237 = scmp.lt.s32.totalorder %s20, 1
      %s238 = scalar_select %p237, %s20, 1
      %p239 = scmp.lt.s32.totalorder %s236, 1
      %s240 = scalar_select %p239, %s236, 1
      %s241 = smul.addr %s238, 2
      %s242 = sadd.s32 %s240, %s241
      %s243 = smul.addr %s242, 4
      %s244 = scalar_lea.vmem %s0, %s243
      %s245 = smul.u32 2, %s21
      %s246 = smul.u32 2, %s19
      %p247 = scmp.lt.s32.totalorder %s246, 1
      %s248 = scalar_select %p247, %s246, 1
      %s249 = smul.addr %s248, 8
      %s250 = scalar_lea.vmem %s1, %s249
      %s251 = smul.u32 2, %s19
      %s252 = smul.u32 2, %s19
      %p253 = scmp.lt.s32.totalorder %s252, 1
      %s254 = scalar_select %p253, %s252, 1
      %s255 = smul.addr %s254, 8
      %s256 = scalar_lea.vmem %s2, %s255
      %s257 = smul.u32 2, %s19
      %s258 = smul.u32 2, %s19
      %s259 = smul.u32 2, %s21
      %p260 = scmp.lt.s32.totalorder %s20, 1
      %s261 = scalar_select %p260, %s20, 1
      %p262 = scmp.lt.s32.totalorder %s258, 1
      %s263 = scalar_select %p262, %s258, 1
      %p264 = scmp.lt.s32.totalorder %s259, 1
      %s265 = scalar_select %p264, %s259, 1
      %s266 = smul.addr %s263, 2
      %s267 = sadd.s32 %s265, %s266
      %s268 = smul.addr %s261, 4
      %s269 = sadd.s32 %s267, %s268
      %s270 = smul.addr %s269, 8
      %s271 = scalar_lea.vmem %s3, %s270
      %s272 = smul.u32 2, %s19
      %s273 = smul.u32 2, %s21
      %v274 = vld [vmem:[%s244] sm:$0xff]
      %v275 = vld [vmem:[%s250] sm:$0xff]
      %v276 = vld [vmem:[%s250 + $0x8] sm:$0xff]
      %v277 = vld [vmem:[%s256] sm:$0xff]
      %v278 = vld [vmem:[%s256 + $0x8] sm:$0xff]
      %280 = vset.pattern.permute.xlu0 0
      %281 = vperm.xlu0 %280, %v277
      %v282 = vpop.permute.xlu0 %281
      %285 = vset.pattern.permute.xlu0 0
      %286 = vperm.xlu0 %285, %v278
      %v287 = vpop.permute.xlu0 %286
      %290 = vst [vmem:[#allocation1] ss:$2 sm:$0xff] %v274
      %v291 = vld.sshfl [vmem:[#allocation1] sm:$0xff pattern:$0x75316420]
      %v292 = vld.sshfl [vmem:[#allocation1 + $0x8] sm:$0xff pattern:$0x75316420]
      %vm293 = vcmask 31744
      %v295 = vsel %vm293, %v275, 0
      %v298 = vsel %vm293, %v276, 0
      %vm300 = vcmask 1043456
      %v301 = vsel %vm300, %v291, 0
      %v303 = vsel %vm300, %v292, 0
      %305 = vmatpush.msra.mxu0 0.0
      %306 = vmatpush.msra.mxu0 0.0
      %307 = vmatpush.msra.mxu0 0.0
      %308 = vmatpush.msra.mxu0 0.0
      %309 = vmatpush.msra.mxu0 0.0
      %310 = vmatpush.msra.mxu0 0.0
      %311 = vmatpush.msra.mxu0 0.0
      %312 = vmatpush.msra.mxu0 0.0
      %313 = vmatpush.msra.mxu0 0.0
      %314 = vmatpush.msra.mxu0 0.0
      %315 = vmatpush.msra.mxu0 0.0
      %316 = vmatpush.msra.mxu0 0.0
      %317 = vmatpush.msra.mxu0 0.0
      %318 = vmatpush.msra.mxu0 0.0
      %319 = vmatpush.msra.mxu0 0.0
      %320 = vmatpush.msra.mxu0 %v301
      %321 = vmatmul.f32.gmra.mxu0 %v295
      %v322 = vpop.f32.mrf.mxu0
      %v323 = vadd.f32 %v282, %v322
      %324 = vmatmul.f32.gmra.mxu0 %v298
      %v325 = vpop.f32.mrf.mxu0
      %v326 = vadd.f32 %v287, %v325
      %327 = vdwg.mxu0
      %328 = vmatpush.msra.mxu0 0.0
      %329 = vmatpush.msra.mxu0 0.0
      %330 = vmatpush.msra.mxu0 0.0
      %331 = vmatpush.msra.mxu0 0.0
      %332 = vmatpush.msra.mxu0 0.0
      %333 = vmatpush.msra.mxu0 0.0
      %334 = vmatpush.msra.mxu0 0.0
      %335 = vmatpush.msra.mxu0 0.0
      %336 = vmatpush.msra.mxu0 0.0
      %337 = vmatpush.msra.mxu0 0.0
      %338 = vmatpush.msra.mxu0 0.0
      %339 = vmatpush.msra.mxu0 0.0
      %340 = vmatpush.msra.mxu0 0.0
      %341 = vmatpush.msra.mxu0 0.0
      %342 = vmatpush.msra.mxu0 0.0
      %343 = vmatpush.msra.mxu0 %v303
      %344 = vmatmul.f32.gmra.mxu0 %v295
      %v345 = vpop.f32.mrf.mxu0
      %v346 = vadd.f32 %v282, %v345
      %347 = vmatmul.f32.gmra.mxu0 %v298
      %v348 = vpop.f32.mrf.mxu0
      %v349 = vadd.f32 %v287, %v348
      %350 = vdwg.mxu0
      %v351 = vxor.u32 %v323, 2147483648
      %v352 = vxor.u32 %v346, 2147483648
      %v353 = vxor.u32 %v326, 2147483648
      %v354 = vxor.u32 %v349, 2147483648
      %v355 = vmul.f32 %v351, 1.442695
      %v356 = vpow.pop %v355
      %v357 = vmul.f32 %v352, 1.442695
      %v358 = vpow.pop %v357
      %v359 = vmul.f32 %v353, 1.442695
      %v360 = vpow.pop %v359
      %v361 = vmul.f32 %v354, 1.442695
      %v362 = vpow.pop %v361
      %v363 = vadd.f32 %v356, 1.0
      %v364 = vadd.f32 %v358, 1.0
      %v365 = vadd.f32 %v360, 1.0
      %v366 = vadd.f32 %v362, 1.0
      %v367 = vrcp.pop %v363
      %v368 = vmul.f32 %v363, %v367
      %v369 = vsub.f32 1.0, %v368
      %v370 = vmul.f32 %v367, %v369
      %v371 = vadd.f32 %v367, %v370
      %vm372 = vweird.f32 %v363
      %vm373 = vweird.f32 %v367
      %vm374 = vmor %vm372, %vm373
      %v375 = vsel %vm374, %v367, %v371
      %v376 = vand.u32 2147483647, %v363
      %vm377 = vcmp.eq.f32.partialorder %v376, 8.507059e+37
      %v378 = vand.u32 %v363, 2147483648
      %v379 = vor.u32 1.1754944e-38, %v378
      %v380 = vsel %vm377, %v379, %v375
      %v381 = vmul.f32 1.0, %v380
      %v382 = vrcp.pop %v364
      %v383 = vmul.f32 %v364, %v382
      %v384 = vsub.f32 1.0, %v383
      %v385 = vmul.f32 %v382, %v384
      %v386 = vadd.f32 %v382, %v385
      %vm387 = vweird.f32 %v364
      %vm388 = vweird.f32 %v382
      %vm389 = vmor %vm387, %vm388
      %v390 = vsel %vm389, %v382, %v386
      %v391 = vand.u32 2147483647, %v364
      %vm392 = vcmp.eq.f32.partialorder %v391, 8.507059e+37
      %v393 = vand.u32 %v364, 2147483648
      %v394 = vor.u32 1.1754944e-38, %v393
      %v395 = vsel %vm392, %v394, %v390
      %v396 = vmul.f32 1.0, %v395
      %v397 = vrcp.pop %v365
      %v398 = vmul.f32 %v365, %v397
      %v399 = vsub.f32 1.0, %v398
      %v400 = vmul.f32 %v397, %v399
      %v401 = vadd.f32 %v397, %v400
      %vm402 = vweird.f32 %v365
      %vm403 = vweird.f32 %v397
      %vm404 = vmor %vm402, %vm403
      %v405 = vsel %vm404, %v397, %v401
      %v406 = vand.u32 2147483647, %v365
      %vm407 = vcmp.eq.f32.partialorder %v406, 8.507059e+37
      %v408 = vand.u32 %v365, 2147483648
      %v409 = vor.u32 1.1754944e-38, %v408
      %v410 = vsel %vm407, %v409, %v405
      %v411 = vmul.f32 1.0, %v410
      %v412 = vrcp.pop %v366
      %v413 = vmul.f32 %v366, %v412
      %v414 = vsub.f32 1.0, %v413
      %v415 = vmul.f32 %v412, %v414
      %v416 = vadd.f32 %v412, %v415
      %vm417 = vweird.f32 %v366
      %vm418 = vweird.f32 %v412
      %vm419 = vmor %vm417, %vm418
      %v420 = vsel %vm419, %v412, %v416
      %v421 = vand.u32 2147483647, %v366
      %vm422 = vcmp.eq.f32.partialorder %v421, 8.507059e+37
      %v423 = vand.u32 %v366, 2147483648
      %v424 = vor.u32 1.1754944e-38, %v423
      %v425 = vsel %vm422, %v424, %v420
      %v426 = vmul.f32 1.0, %v425
      %v427 = vmul.f32 %v323, %v381
      %v428 = vmul.f32 %v346, %v396
      %v429 = vmul.f32 %v326, %v411
      %v430 = vmul.f32 %v349, %v426
      %431 = vst [vmem:[%s271] sm:$0xff] %v427
      %432 = vst [vmem:[%s271 + $0x8] sm:$0xff] %v428
      %433 = vst [vmem:[%s271 + $0x10] sm:$0xff] %v429
      %434 = vst [vmem:[%s271 + $0x18] sm:$0xff] %v430
      %s435 = smul.u32 2, %s19
      %s436 = smul.u32 2, %s21
      %p437 = scmp.lt.s32.totalorder %s20, 1
      %s438 = scalar_select %p437, %s20, 1
      %p439 = scmp.lt.s32.totalorder %s435, 1
      %s440 = scalar_select %p439, %s435, 1
      %p441 = scmp.lt.s32.totalorder %s436, 1
      %s442 = scalar_select %p441, %s436, 1
      %s443 = smul.addr %s440, 2
      %s444 = sadd.s32 %s442, %s443
      %s445 = smul.addr %s438, 4
      %s446 = sadd.s32 %s444, %s445
      %s447 = smul.addr %s446, 8
      %s448 = scalar_lea.vmem %s3, %s447
      // Predicated region
      $region33: #{pixel_shuffle_upsample.1} parent=31 // pred_check
        %p449 = pneg %p135
      $region34: #{pixel_shuffle_upsample.1} parent=31 // pred_check_branch
        %451 = sbr.rel (%p449) target = $region36
      $region35: #{pixel_shuffle_upsample.1} parent=31 // pred_region
        %s452 = smul.u32 2, %s19
        %s453 = smul.u32 2, %s21
      $region36: #{pixel_shuffle_upsample.1} parent=31 // pred_fallthru
        _
    $region32: #{pixel_shuffle_upsample.1} parent=5 // pred_fallthru
      _
    %p454 = scmp.le.s32.totalorder 2, %s9
    // Predicated region
    $region37: #{pixel_shuffle_upsample.1} parent=5 // pred_check
      %p455 = pneg %p454
    $region38: #{pixel_shuffle_upsample.1} parent=5 // pred_check_branch
      %457 = sbr.rel (%p455) target = $region40
    $region39: #{pixel_shuffle_upsample.1} parent=5 // pred_region
      %s458 = ssub.s32 %s9, 2
      // Predicated region
      $region41: #{pixel_shuffle_upsample.1} parent=39 // pred_check
        %p459 = pneg %p141
      $region42: #{pixel_shuffle_upsample.1} parent=39 // pred_check_branch
        %461 = sbr.rel (%p459) target = $region44
      $region43: #{pixel_shuffle_upsample.1} parent=39 // pred_region
        %s462 = smul.u32 2, %s22
        %s463 = smul.u32 2, %s24
        %p464 = scmp.lt.s32.totalorder %s23, 1
        %s465 = scalar_select %p464, %s23, 1
        %p466 = scmp.lt.s32.totalorder %s462, 1
        %s467 = scalar_select %p466, %s462, 1
        %p468 = scmp.lt.s32.totalorder %s463, 1
        %s469 = scalar_select %p468, %s463, 1
        %s470 = smul.addr %s467, 2
        %s471 = sadd.s32 %s469, %s470
        %s472 = smul.addr %s465, 4
        %s473 = sadd.s32 %s471, %s472
        %s474 = smul.addr %s473, 8
        %s475 = scalar_lea.vmem %s3, %s474
      $region44: #{pixel_shuffle_upsample.1} parent=39 // pred_fallthru
        _
    $region40: #{pixel_shuffle_upsample.1} parent=5 // pred_fallthru
      _
  $region6: #{pixel_shuffle_upsample.1} parent=0 // loop_footer
    %s13 = sadd.s32 1, %s9
  $region7: #{pixel_shuffle_upsample.1} parent=0 // loop_footer_branch
    %8 = sbr.rel target = $region3
  $region8: #{pixel_shuffle_upsample.1} parent=0 // loop_exit
    _

</llo_original>
